<compile_context>
chip_gen: v7x
topology: tpu7x:2x2x1
jax: 0.10.0
libtpu: 0.0.40
codegen_flags: <defaults>
</compile_context>

<pallas_src>
from functools import partial
from typing import List, Tuple

import jax
import jax.numpy as jnp
from jax.experimental import pallas as pl
from jax.experimental.pallas import tpu as pltpu


def _round_up(x: int, m: int) -> int:
    return ((x + m - 1) // m) * m


# ----------------------------------------------------------------------------
# Kernel
# ----------------------------------------------------------------------------
def _decoder_kernel(layer_specs, p_out, x_ref, w_ref, b_ref, out_ref):
    """One batch tile of the whole decoder MLP.

    layer_specs: static tuple of (row_offset, bias_row, d_in, d_out, apply_sigmoid)
                 describing each packed layer (hidden layers + fused head).
    p_out:       padded width of one head; out_ref is [mean || std], each p_out wide.
    """
    h = x_ref[...].astype(jnp.float32)

    for (row_off, bias_row, d_in, d_out, apply_sigmoid) in layer_specs:
        # Static, 128-aligned slices out of the packed weight / bias slabs.
        w = w_ref[row_off:row_off + d_in, 0:d_out]           # bf16 operand
        b = b_ref[bias_row:bias_row + 1, 0:d_out]            # f32 bias
        # bf16 x bf16 -> f32 accumulate: native MXU path on v6e/v7x.
        h = jnp.dot(h.astype(w_ref.dtype), w,
                    preferred_element_type=jnp.float32) + b
        if apply_sigmoid:
            h = jax.nn.sigmoid(h)                             # f32 VPU/EUP path

    # h is the fused head output: [:, :p_out] = mean, [:, p_out:] = log_std.
    # std = sqrt(exp(log_std)) = exp(0.5 * log_std), computed in f32.
    out_ref[:, :p_out] = h[:, :p_out].astype(out_ref.dtype)
    out_ref[:, p_out:] = jnp.exp(0.5 * h[:, p_out:]).astype(out_ref.dtype)


# ----------------------------------------------------------------------------
# One-time parameter prepacking (NOT on the per-call hot path)
# ----------------------------------------------------------------------------
def prepack_decoder_params(params: dict, input_dim: int,
                           *, weight_dtype=jnp.bfloat16):
    """Pack all decoder parameters into two resident slabs.

    Returns ((w_packed, b_packed), config) where config is a static, hashable
    tuple describing the packed layout for the kernel.
    """
    hidden = params["hidden"]
    wm, bm = params["mean"]
    ws, bs = params["log_std"]

    z_dim = hidden[0][0].shape[0] if hidden else wm.shape[0]
    arch = [z_dim] + [w.shape[1] for (w, _) in hidden]
    arch_pad = [_round_up(d, 128) for d in arch]
    p_out = _round_up(input_dim, 128)
    head_out = 2 * p_out

    # ---- Fused head: [W_mean | 0 | W_logstd | 0], lane-dense 128-aligned halves.
    w_head = jnp.zeros((arch[-1], head_out), jnp.float32)
    w_head = w_head.at[:, :input_dim].set(wm.astype(jnp.float32))
    w_head = w_head.at[:, p_out:p_out + input_dim].set(ws.astype(jnp.float32))
    b_head = jnp.zeros((head_out,), jnp.float32)
    b_head = b_head.at[:input_dim].set(bm.reshape(-1).astype(jnp.float32))
    b_head = b_head.at[p_out:p_out + input_dim].set(bs.reshape(-1).astype(jnp.float32))

    # ---- Pack every layer into ONE bf16 weight slab and ONE f32 bias slab.
    layers = []  # (W (unpadded rows/cols), b (unpadded), d_in_pad, d_out_pad)
    for li, (w, b) in enumerate(hidden):
        layers.append((w.astype(jnp.float32), b.reshape(-1).astype(jnp.float32),
                       arch_pad[li], arch_pad[li + 1]))
    layers.append((w_head, b_head, arch_pad[-1], head_out))

    n_layers = len(layers)
    max_out = max(d_out for (_, _, _, d_out) in layers)
    total_rows = sum(d_in for (_, _, d_in, _) in layers)
    n_layers_pad = _round_up(n_layers, 8)

    w_packed = jnp.zeros((total_rows, max_out), weight_dtype)
    b_packed = jnp.zeros((n_layers_pad, max_out), jnp.float32)
    layer_specs = []
    row_off = 0
    for li, (w, b, d_in, d_out) in enumerate(layers):
        w_packed = w_packed.at[row_off:row_off + w.shape[0], :w.shape[1]].set(
            w.astype(weight_dtype))
        b_packed = b_packed.at[li, :b.shape[0]].set(b)
        apply_sigmoid = li < n_layers - 1  # fused head has no activation
        layer_specs.append((row_off, li, d_in, d_out, apply_sigmoid))
        row_off += d_in

    config = (tuple(layer_specs), p_out, int(input_dim), arch_pad[0],
              total_rows, max_out, n_layers_pad)
    w_packed = jax.device_put(w_packed)
    b_packed = jax.device_put(b_packed)
    return (w_packed, b_packed), config


# ----------------------------------------------------------------------------
# Forward (jit-friendly: only pads the batch and launches the kernel)
# ----------------------------------------------------------------------------
def decoder_forward(x: jax.Array, w_packed: jax.Array, b_packed: jax.Array,
                    *, config, batch_tile: int = 1024
                    ) -> Tuple[jax.Array, jax.Array]:
    """Run the Decoder forward pass in a single pallas_call. Returns (mean, std)."""
    (layer_specs, p_out, input_dim, z_pad, total_rows, max_out, n_layers_pad) = config
    batch, z_dim = x.shape
    head_out = 2 * p_out

    # Batch tile: as tall as possible (amortize per-step pipeline overhead),
    # but guarantee >= 2 grid steps when batch > 8 so the "parallel" axis can
    # shard across v7x's two TensorCores.
    tb = min(batch_tile, _round_up(batch, 8))
    if _round_up(batch, tb) // tb == 1 and batch > 8:
        tb = max(8, _round_up(pl.cdiv(batch, 2), 8))
    b_pad = _round_up(batch, tb)

    # Pad input: batch -> multiple of tb, z -> multiple of 128 (zeros are inert:
    # zero weight rows make padded z-columns contribute nothing).
    x_p = jnp.zeros((b_pad, z_pad), jnp.float32)
    x_p = x_p.at[:batch, :z_dim].set(x.astype(jnp.float32))

    grid = (b_pad // tb,)

    out = pl.pallas_call(
        partial(_decoder_kernel, layer_specs, p_out),
        out_shape=jax.ShapeDtypeStruct((b_pad, head_out), x.dtype),
        grid_spec=pl.GridSpec(
            grid=grid,
            in_specs=[
                pl.BlockSpec((tb, z_pad), lambda i: (i, 0)),              # tiled input
                pl.BlockSpec((total_rows, max_out), lambda i: (0, 0)),    # resident weights
                pl.BlockSpec((n_layers_pad, max_out), lambda i: (0, 0)),  # resident biases
            ],
            out_specs=pl.BlockSpec((tb, head_out), lambda i: (i, 0)),     # lane-dense output
        ),
        compiler_params=pltpu.CompilerParams(
            dimension_semantics=("parallel",),
            vmem_limit_bytes=32 * 1024 * 1024,
        ),
    )(x_p, w_packed, b_packed)

    mean = out[:batch, :input_dim]
    std = out[:batch, p_out:p_out + input_dim]
    return mean, std


# ----------------------------------------------------------------------------
# Synthetic parameters + references
# ----------------------------------------------------------------------------
def init_decoder_params(key, input_dim: int, hidden_dims: List[int], z_dim: int):
    """Deterministic synthetic parameter init (shapes match the nn.Linear layers)."""
    architecture = [z_dim] + hidden_dims
    params = {"hidden": []}
    for i in range(len(architecture) - 1):
        key, kw, kb = jax.random.split(key, 3)
        fan_in, fan_out = architecture[i], architecture[i + 1]
        bound = 1.0 / jnp.sqrt(fan_in)
        w = jax.random.uniform(kw, (fan_in, fan_out), jnp.float32, -bound, bound)
        b = jax.random.uniform(kb, (fan_out,), jnp.float32, -bound, bound)
        params["hidden"].append((w, b))

    last = architecture[-1]
    bound = 1.0 / jnp.sqrt(last)
    key, kw1, kb1, kw2, kb2 = jax.random.split(key, 5)
    params["mean"] = (
        jax.random.uniform(kw1, (last, input_dim), jnp.float32, -bound, bound),
        jax.random.uniform(kb1, (input_dim,), jnp.float32, -bound, bound),
    )
    params["log_std"] = (
        jax.random.uniform(kw2, (last, input_dim), jnp.float32, -bound, bound),
        jax.random.uniform(kb2, (input_dim,), jnp.float32, -bound, bound),
    )
    return params


def decoder_reference(x, params, *, weight_dtype=None):
    """Plain-JAX reference. weight_dtype=bf16 emulates the kernel's MXU operands."""
    def mm(h, w, b):
        if weight_dtype is not None:
            return jnp.dot(h.astype(weight_dtype), w.astype(weight_dtype),
                           preferred_element_type=jnp.float32) + b
        return h @ w + b

    h = x.astype(jnp.float32)
    for (w, b) in params["hidden"]:
        h = jax.nn.sigmoid(mm(h, w, b))
    mean = mm(h, *params["mean"])
    log_std = mm(h, *params["log_std"])
    std = jnp.sqrt(jnp.exp(log_std))
    return mean, std


if __name__ == "__main__":
    # Small shapes consistent with the module: latent z_dim=8 -> hidden [32, 32]
    # -> reconstructed input_dim=16, batch=8.
    batch, input_dim, hidden_dims, z_dim = 8, 16, [32, 32], 8

    key = jax.random.PRNGKey(0)
    key, kx = jax.random.split(key)
    z = jax.random.normal(kx, (batch, z_dim), jnp.float32)

    params = init_decoder_params(key, input_dim, hidden_dims, z_dim)

    # One-time prepack (off the hot path), then a jitted forward.
    (w_packed, b_packed), config = prepack_decoder_params(params, input_dim)
    fwd = jax.jit(partial(decoder_forward, config=config))

    mean, std = fwd(z, w_packed, b_packed)
    jax.block_until_ready((mean, std))

    assert mean.shape == (batch, input_dim) and std.shape == (batch, input_dim)

    # Tight check vs. a reference that uses the same bf16 MXU operands.
    mean_q, std_q = decoder_reference(z, params, weight_dtype=jnp.bfloat16)
    assert jnp.allclose(mean, mean_q, atol=1e-4, rtol=1e-4)
    assert jnp.allclose(std, std_q, atol=1e-4, rtol=1e-4)

    # Looser check vs. the pure-f32 module semantics (bf16 weight rounding).
    mean_ref, std_ref = decoder_reference(z, params)
    assert jnp.allclose(mean, mean_ref, atol=2e-2, rtol=2e-2)
    assert jnp.allclose(std, std_ref, atol=2e-2, rtol=2e-2)

    print("KERNEL_OK")
</pallas_src>

<mosaic_0001>
module attributes {stable_mosaic.version = 11 : i64} {
  func.func @_decoder_kernel(%arg0: i32, %arg1: memref<8x128xf32, #tpu.memory_space<vmem>>, %arg2: memref<384x256xbf16, #tpu.memory_space<vmem>>, %arg3: memref<8x256xf32, #tpu.memory_space<vmem>>, %arg4: memref<8x256xf32, #tpu.memory_space<vmem>>) attributes {dimension_semantics = [#tpu.dimension_semantics<parallel>], iteration_bounds = array<i64: 1>, scalar_prefetch = 0 : i64, scratch_operands = 0 : i64, tpu.core_type = #tpu.core_type<tc>, window_params = [{transform_indices = @transform_0, window_bounds = array<i64: 8, 128>}, {pipeline_mode = #tpu.pipeline_mode<synchronous>, transform_indices = @transform_1, window_bounds = array<i64: 384, 256>}, {pipeline_mode = #tpu.pipeline_mode<synchronous>, transform_indices = @transform_2, window_bounds = array<i64: 8, 256>}, {transform_indices = @transform_3, window_bounds = array<i64: 8, 256>}]} {
    %c0 = arith.constant 0 : index
    %c0_0 = arith.constant 0 : index
    %0 = vector.load %arg1[%c0, %c0_0] : memref<8x128xf32, #tpu.memory_space<vmem>>, vector<8x128xf32>
    %c0_1 = arith.constant 0 : index
    %c0_2 = arith.constant 0 : index
    %1 = vector.load %arg2[%c0_1, %c0_2] : memref<384x256xbf16, #tpu.memory_space<vmem>>, vector<128x128xbf16>
    %c0_3 = arith.constant 0 : index
    %c0_4 = arith.constant 0 : index
    %2 = vector.load %arg3[%c0_3, %c0_4] : memref<8x256xf32, #tpu.memory_space<vmem>>, vector<1x128xf32>
    %3 = arith.truncf %0 : vector<8x128xf32> to vector<8x128xbf16>
    %cst = arith.constant dense<0.000000e+00> : vector<8x128xf32>
    %4 = tpu.matmul %3, %1, %cst {dimension_numbers = #tpu.dot_dimension_numbers<[1], [0], [0], [1], [0, 0, 1, 1], [], []>} : vector<8x128xbf16>, vector<128x128xbf16>, vector<8x128xf32> -> vector<8x128xf32>
    %5 = vector.broadcast %2 : vector<1x128xf32> to vector<8x128xf32>
    %6 = arith.addf %4, %5 : vector<8x128xf32>
    %7 = arith.negf %6 : vector<8x128xf32>
    %8 = math.exp %7 : vector<8x128xf32>
    %cst_5 = arith.constant 1.000000e+00 : f32
    %9 = vector.broadcast %cst_5 : f32 to vector<8x128xf32>
    %10 = arith.addf %9, %8 : vector<8x128xf32>
    %11 = arith.divf %9, %10 : vector<8x128xf32>
    %c128 = arith.constant 128 : index
    %c0_6 = arith.constant 0 : index
    %12 = vector.load %arg2[%c128, %c0_6] : memref<384x256xbf16, #tpu.memory_space<vmem>>, vector<128x128xbf16>
    %c1 = arith.constant 1 : index
    %c0_7 = arith.constant 0 : index
    %13 = vector.load %arg3[%c1, %c0_7] : memref<8x256xf32, #tpu.memory_space<vmem>>, vector<1x128xf32>
    %14 = arith.truncf %11 : vector<8x128xf32> to vector<8x128xbf16>
    %cst_8 = arith.constant dense<0.000000e+00> : vector<8x128xf32>
    %15 = tpu.matmul %14, %12, %cst_8 {dimension_numbers = #tpu.dot_dimension_numbers<[1], [0], [0], [1], [0, 0, 1, 1], [], []>} : vector<8x128xbf16>, vector<128x128xbf16>, vector<8x128xf32> -> vector<8x128xf32>
    %16 = vector.broadcast %13 : vector<1x128xf32> to vector<8x128xf32>
    %17 = arith.addf %15, %16 : vector<8x128xf32>
    %18 = arith.negf %17 : vector<8x128xf32>
    %19 = math.exp %18 : vector<8x128xf32>
    %cst_9 = arith.constant 1.000000e+00 : f32
    %20 = vector.broadcast %cst_9 : f32 to vector<8x128xf32>
    %21 = arith.addf %20, %19 : vector<8x128xf32>
    %22 = arith.divf %20, %21 : vector<8x128xf32>
    %c256 = arith.constant 256 : index
    %c0_10 = arith.constant 0 : index
    %23 = vector.load %arg2[%c256, %c0_10] : memref<384x256xbf16, #tpu.memory_space<vmem>>, vector<128x256xbf16>
    %c2 = arith.constant 2 : index
    %c0_11 = arith.constant 0 : index
    %24 = vector.load %arg3[%c2, %c0_11] : memref<8x256xf32, #tpu.memory_space<vmem>>, vector<1x256xf32>
    %25 = arith.truncf %22 : vector<8x128xf32> to vector<8x128xbf16>
    %cst_12 = arith.constant dense<0.000000e+00> : vector<8x256xf32>
    %26 = tpu.matmul %25, %23, %cst_12 {dimension_numbers = #tpu.dot_dimension_numbers<[1], [0], [0], [1], [0, 0, 1, 1], [], []>} : vector<8x128xbf16>, vector<128x256xbf16>, vector<8x256xf32> -> vector<8x256xf32>
    %27 = vector.broadcast %24 : vector<1x256xf32> to vector<8x256xf32>
    %28 = arith.addf %26, %27 : vector<8x256xf32>
    %29 = vector.extract_strided_slice %28 {offsets = [0, 0], sizes = [8, 128], strides = [1, 1]} : vector<8x256xf32> to vector<8x128xf32>
    %c0_13 = arith.constant 0 : index
    %c0_14 = arith.constant 0 : index
    %30 = vector.load %arg4[%c0_13, %c0_14] : memref<8x256xf32, #tpu.memory_space<vmem>>, vector<8x128xf32>
    tpu.vector_store %arg4[%c0_13, %c0_14], %29 {strides = array<i32>} : memref<8x256xf32, #tpu.memory_space<vmem>>, vector<8x128xf32>,
    %31 = vector.extract_strided_slice %28 {offsets = [0, 128], sizes = [8, 128], strides = [1, 1]} : vector<8x256xf32> to vector<8x128xf32>
    %cst_15 = arith.constant 5.000000e-01 : f32
    %32 = vector.broadcast %cst_15 : f32 to vector<8x128xf32>
    %33 = arith.mulf %32, %31 : vector<8x128xf32>
    %34 = math.exp %33 : vector<8x128xf32>
    %c0_16 = arith.constant 0 : index
    %c128_17 = arith.constant 128 : index
    %35 = vector.load %arg4[%c0_16, %c128_17] : memref<8x256xf32, #tpu.memory_space<vmem>>, vector<8x128xf32>
    tpu.vector_store %arg4[%c0_16, %c128_17], %34 {strides = array<i32>} : memref<8x256xf32, #tpu.memory_space<vmem>>, vector<8x128xf32>,
    return
  }
  func.func @transform_0(%arg0: i32) -> (i32, i32) {
    %c0_i32 = arith.constant 0 : i32
    %c0_i32_0 = arith.constant 0 : i32
    return %arg0, %c0_i32 : i32, i32
  }
  func.func @transform_1(%arg0: i32) -> (i32, i32) {
    %c0_i32 = arith.constant 0 : i32
    %c0_i32_0 = arith.constant 0 : i32
    %c0_i32_1 = arith.constant 0 : i32
    return %c0_i32, %c0_i32_0 : i32, i32
  }
  func.func @transform_2(%arg0: i32) -> (i32, i32) {
    %c0_i32 = arith.constant 0 : i32
    %c0_i32_0 = arith.constant 0 : i32
    %c0_i32_1 = arith.constant 0 : i32
    return %c0_i32, %c0_i32_0 : i32, i32
  }
  func.func @transform_3(%arg0: i32) -> (i32, i32) {
    %c0_i32 = arith.constant 0 : i32
    %c0_i32_0 = arith.constant 0 : i32
    return %arg0, %c0_i32 : i32, i32
  }
}

</mosaic_0001>

<llo_original>
// kernel: decoder_forward.1
$region0: #{decoder_forward.1}
  #allocation0 [shape = 'u32[]', space=smem, size = 0x4, offset = 0x4, fixed_abs, tag = 'smem constant byte address 0x4 - core index']
  #allocation1 [shape = 'u32[144,128]{1,0:T(1,128)}', space=vmem, size = 0x12000, scoped, tag = 'internal scratch']
  %s0 = inlined_call_operand.vmem [shape: f32[8,128], index: 0, kind: input, shape index: {}]
  %s1 = inlined_call_operand.hbm [shape: bf16[384,256], index: 1, kind: input, shape index: {}]
  %s2 = inlined_call_operand.vmem [shape: f32[8,256], index: 2, kind: input, shape index: {}]
  %s3 = inlined_call_operand.vmem [shape: f32[8,256], index: 3, kind: output, shape index: {}]
  %s4 = sld [smem:[#allocation0]]
  $region26: #{decoder_forward.1} parent=0
    _
  %s6 = ssub.s32 1, %s4
  %s7 = scalar_select 0, %s6, %s4
  $region1: #{decoder_forward.1} parent=0
    #allocation2 [shape = 'u8[196608]{0}', space=vmem, size = 0x30000, scoped, tag = 'input window, operand 1, single buffered']
    #allocation3 [shape = 's32[1]{0}', space=sflag, size = 0x4, scoped, tag = 'scoped memory for decoder_forward.1']
    %8 = vsyncpa [#allocation3], 0
    // Predicated region
    $region2: #{decoder_forward.1} parent=1 // pred_check
      _
    $region3: #{decoder_forward.1} parent=1 // pred_check_branch
      %10 = sbr.rel (0) target = $region5
    $region4: #{decoder_forward.1} parent=1 // pred_region
      _
    $region5: #{decoder_forward.1} parent=1 // pred_fallthru
      _
    // Predicated region
    $region6: #{decoder_forward.1} parent=1 // pred_check
      _
    $region7: #{decoder_forward.1} parent=1 // pred_check_branch
      %12 = sbr.rel (0) target = $region9
    $region8: #{decoder_forward.1} parent=1 // pred_region
      %s14 = ssub.s32 6144, 6144
      %15 = vsyncadd [#allocation3], %s14
      %s16 = sshll.u32 [#allocation2], 4
      %s17 = int_to_ptr.vmem [resolvable:$true] %s16
      %22 = dma.hbm_to_vmem [thread:$0]  %s1, 6144, %s17, [#allocation3], 128, 128, 8
    $region9: #{decoder_forward.1} parent=1 // pred_fallthru
      _
    // Predicated region
    $region10: #{decoder_forward.1} parent=1 // pred_check
      _
    $region11: #{decoder_forward.1} parent=1 // pred_check_branch
      %24 = sbr.rel (0) target = $region13
    $region12: #{decoder_forward.1} parent=1 // pred_region
      _
    $region13: #{decoder_forward.1} parent=1 // pred_fallthru
      _
    // Predicated region
    $region14: #{decoder_forward.1} parent=1 // pred_check
      _
    $region15: #{decoder_forward.1} parent=1 // pred_check_branch
      %26 = sbr.rel (0) target = $region17
    $region16: #{decoder_forward.1} parent=1 // pred_region
      %27 = dma.done [#allocation3], 6144
    $region17: #{decoder_forward.1} parent=1 // pred_fallthru
      _
    %v29 = vld [vmem:[%s0] sm:$0xff]
    %v30 = vld [vmem:[#allocation2] sm:$0xf]
    %v31 = vld [vmem:[#allocation2 + $0x8] sm:$0xf]
    %v32 = vld [vmem:[#allocation2 + $0x10] sm:$0xf]
    %v33 = vld [vmem:[#allocation2 + $0x18] sm:$0xf]
    %v34 = vld [vmem:[#allocation2 + $0x20] sm:$0xf]
    %v35 = vld [vmem:[#allocation2 + $0x28] sm:$0xf]
    %v36 = vld [vmem:[#allocation2 + $0x30] sm:$0xf]
    %v37 = vld [vmem:[#allocation2 + $0x38] sm:$0xf]
    %v38 = vld [vmem:[#allocation2 + $0x40] sm:$0xf]
    %v39 = vld [vmem:[#allocation2 + $0x48] sm:$0xf]
    %v40 = vld [vmem:[#allocation2 + $0x50] sm:$0xf]
    %v41 = vld [vmem:[#allocation2 + $0x58] sm:$0xf]
    %v42 = vld [vmem:[#allocation2 + $0x60] sm:$0xf]
    %v43 = vld [vmem:[#allocation2 + $0x68] sm:$0xf]
    %v44 = vld [vmem:[#allocation2 + $0x70] sm:$0xf]
    %v45 = vld [vmem:[#allocation2 + $0x78] sm:$0xf]
    %v46 = vld [vmem:[%s2] ss:$0 sm:$0xff]
    %v47 = vpack.c.bf16 %v29, %v29
    %v64 = vunpack.c.l.b16 %v30
    %v65 = vunpack.c.l.b16 %v31
    %v66 = vunpack.c.l.b16 %v32
    %v67 = vunpack.c.l.b16 %v33
    %v68 = vunpack.c.l.b16 %v34
    %v69 = vunpack.c.l.b16 %v35
    %v70 = vunpack.c.l.b16 %v36
    %v71 = vunpack.c.l.b16 %v37
    %v72 = vunpack.c.l.b16 %v38
    %v73 = vunpack.c.l.b16 %v39
    %v74 = vunpack.c.l.b16 %v40
    %v75 = vunpack.c.l.b16 %v41
    %v76 = vunpack.c.l.b16 %v42
    %v77 = vunpack.c.l.b16 %v43
    %v78 = vunpack.c.l.b16 %v44
    %v79 = vunpack.c.l.b16 %v45
    %v80 = vpack.c.b16 %v65, %v64
    %v81 = vpack.c.b16 %v67, %v66
    %v82 = vpack.c.b16 %v69, %v68
    %v83 = vpack.c.b16 %v71, %v70
    %v84 = vpack.c.b16 %v73, %v72
    %v85 = vpack.c.b16 %v75, %v74
    %v86 = vpack.c.b16 %v77, %v76
    %v87 = vpack.c.b16 %v79, %v78
    %96 = vmatprep.subr.bf16.mxu0 0
    %97 = vmatpush1.bf16.msra.mxu0 %v80
    %98 = vmatprep.subr.bf16.mxu0 0
    %99 = vmatpush1.bf16.msra.mxu0 %v81
    %100 = vmatprep.subr.bf16.mxu0 0
    %101 = vmatpush1.bf16.msra.mxu0 %v82
    %102 = vmatprep.subr.bf16.mxu0 0
    %103 = vmatpush1.bf16.msra.mxu0 %v83
    %104 = vmatprep.subr.bf16.mxu0 0
    %105 = vmatpush1.bf16.msra.mxu0 %v84
    %106 = vmatprep.subr.bf16.mxu0 0
    %107 = vmatpush1.bf16.msra.mxu0 %v85
    %108 = vmatprep.subr.bf16.mxu0 0
    %109 = vmatpush1.bf16.msra.mxu0 %v86
    %110 = vmatprep.subr.bf16.mxu0 0
    %111 = vmatpush1.bf16.msra.mxu0 %v87
    %112 = vmatprep.subr.bf16.mxu0 0
    %113 = vmatpush1.bf16.msra.mxu0 0
    %114 = vmatprep.subr.bf16.mxu0 0
    %115 = vmatpush1.bf16.msra.mxu0 0
    %116 = vmatprep.subr.bf16.mxu0 0
    %117 = vmatpush1.bf16.msra.mxu0 0
    %118 = vmatprep.subr.bf16.mxu0 0
    %119 = vmatpush1.bf16.msra.mxu0 0
    %120 = vmatprep.subr.bf16.mxu0 0
    %121 = vmatpush1.bf16.msra.mxu0 0
    %122 = vmatprep.subr.bf16.mxu0 0
    %123 = vmatpush1.bf16.msra.mxu0 0
    %124 = vmatprep.subr.bf16.mxu0 0
    %125 = vmatpush1.bf16.msra.mxu0 0
    %126 = vmatprep.subr.bf16.mxu0 0
    %127 = vmatpush1.bf16.msra.mxu0 0
    %128 = vmatprep.mubr.bf16.mxu0 0
    %129 = vmatmul.mubr.bf16.gmra.mrb[0].mxu0 %v47
    %v130 = vpop.f32.mrb[0].mxu0
    %v131 = vadd.f32 %v46, %v130
    %v132 = vpop.f32.mrb[0].mxu0
    %v133 = vpop.f32.mrb[0].mxu0
    %v134 = vpop.f32.mrb[0].mxu0
    %135 = vdwg.mxu0
    %v136 = vxor.u32 %v131, 2147483648
    %v137 = vmul.f32 %v136, 1.442695
    %v138 = vpow.pop %v137
    %v139 = vadd.f32 %v138, 1.0
    %v140 = vrcp.pop %v139
    %v141 = vmul.f32 1.0, %v140
    %v142 = vld [vmem:[#allocation2 + $0x80] sm:$0xf]
    %v143 = vld [vmem:[#allocation2 + $0x88] sm:$0xf]
    %v144 = vld [vmem:[#allocation2 + $0x90] sm:$0xf]
    %v145 = vld [vmem:[#allocation2 + $0x98] sm:$0xf]
    %v146 = vld [vmem:[#allocation2 + $0xa0] sm:$0xf]
    %v147 = vld [vmem:[#allocation2 + $0xa8] sm:$0xf]
    %v148 = vld [vmem:[#allocation2 + $0xb0] sm:$0xf]
    %v149 = vld [vmem:[#allocation2 + $0xb8] sm:$0xf]
    %v150 = vld [vmem:[#allocation2 + $0xc0] sm:$0xf]
    %v151 = vld [vmem:[#allocation2 + $0xc8] sm:$0xf]
    %v152 = vld [vmem:[#allocation2 + $0xd0] sm:$0xf]
    %v153 = vld [vmem:[#allocation2 + $0xd8] sm:$0xf]
    %v154 = vld [vmem:[#allocation2 + $0xe0] sm:$0xf]
    %v155 = vld [vmem:[#allocation2 + $0xe8] sm:$0xf]
    %v156 = vld [vmem:[#allocation2 + $0xf0] sm:$0xf]
    %v157 = vld [vmem:[#allocation2 + $0xf8] sm:$0xf]
    %v158 = vld [vmem:[%s2 + $0x1] ss:$0 sm:$0xff]
    %v159 = vpack.c.bf16 %v141, %v141
    %v176 = vunpack.c.l.b16 %v142
    %v177 = vunpack.c.l.b16 %v143
    %v178 = vunpack.c.l.b16 %v144
    %v179 = vunpack.c.l.b16 %v145
    %v180 = vunpack.c.l.b16 %v146
    %v181 = vunpack.c.l.b16 %v147
    %v182 = vunpack.c.l.b16 %v148
    %v183 = vunpack.c.l.b16 %v149
    %v184 = vunpack.c.l.b16 %v150
    %v185 = vunpack.c.l.b16 %v151
    %v186 = vunpack.c.l.b16 %v152
    %v187 = vunpack.c.l.b16 %v153
    %v188 = vunpack.c.l.b16 %v154
    %v189 = vunpack.c.l.b16 %v155
    %v190 = vunpack.c.l.b16 %v156
    %v191 = vunpack.c.l.b16 %v157
    %v192 = vpack.c.b16 %v177, %v176
    %v193 = vpack.c.b16 %v179, %v178
    %v194 = vpack.c.b16 %v181, %v180
    %v195 = vpack.c.b16 %v183, %v182
    %v196 = vpack.c.b16 %v185, %v184
    %v197 = vpack.c.b16 %v187, %v186
    %v198 = vpack.c.b16 %v189, %v188
    %v199 = vpack.c.b16 %v191, %v190
    %208 = vmatprep.subr.bf16.mxu0 0
    %209 = vmatpush1.bf16.msra.mxu0 %v192
    %210 = vmatprep.subr.bf16.mxu0 0
    %211 = vmatpush1.bf16.msra.mxu0 %v193
    %212 = vmatprep.subr.bf16.mxu0 0
    %213 = vmatpush1.bf16.msra.mxu0 %v194
    %214 = vmatprep.subr.bf16.mxu0 0
    %215 = vmatpush1.bf16.msra.mxu0 %v195
    %216 = vmatprep.subr.bf16.mxu0 0
    %217 = vmatpush1.bf16.msra.mxu0 %v196
    %218 = vmatprep.subr.bf16.mxu0 0
    %219 = vmatpush1.bf16.msra.mxu0 %v197
    %220 = vmatprep.subr.bf16.mxu0 0
    %221 = vmatpush1.bf16.msra.mxu0 %v198
    %222 = vmatprep.subr.bf16.mxu0 0
    %223 = vmatpush1.bf16.msra.mxu0 %v199
    %224 = vmatprep.subr.bf16.mxu0 0
    %225 = vmatpush1.bf16.msra.mxu0 0
    %226 = vmatprep.subr.bf16.mxu0 0
    %227 = vmatpush1.bf16.msra.mxu0 0
    %228 = vmatprep.subr.bf16.mxu0 0
    %229 = vmatpush1.bf16.msra.mxu0 0
    %230 = vmatprep.subr.bf16.mxu0 0
    %231 = vmatpush1.bf16.msra.mxu0 0
    %232 = vmatprep.subr.bf16.mxu0 0
    %233 = vmatpush1.bf16.msra.mxu0 0
    %234 = vmatprep.subr.bf16.mxu0 0
    %235 = vmatpush1.bf16.msra.mxu0 0
    %236 = vmatprep.subr.bf16.mxu0 0
    %237 = vmatpush1.bf16.msra.mxu0 0
    %238 = vmatprep.subr.bf16.mxu0 0
    %239 = vmatpush1.bf16.msra.mxu0 0
    %240 = vmatprep.mubr.bf16.mxu0 0
    %241 = vmatmul.mubr.bf16.gmra.mrb[0].mxu0 %v159
    %v242 = vpop.f32.mrb[0].mxu0
    %v243 = vadd.f32 %v158, %v242
    %v244 = vpop.f32.mrb[0].mxu0
    %v245 = vpop.f32.mrb[0].mxu0
    %v246 = vpop.f32.mrb[0].mxu0
    %247 = vdwg.mxu0
    %v248 = vxor.u32 %v243, 2147483648
    %v249 = vmul.f32 %v248, 1.442695
    %v250 = vpow.pop %v249
    %v251 = vadd.f32 %v250, 1.0
    %v252 = vrcp.pop %v251
    %v253 = vmul.f32 1.0, %v252
    %v254 = vld [vmem:[#allocation2 + $0x100] sm:$0xff]
    %v255 = vld [vmem:[#allocation2 + $0x108] sm:$0xff]
    %v256 = vld [vmem:[#allocation2 + $0x110] sm:$0xff]
    %v257 = vld [vmem:[#allocation2 + $0x118] sm:$0xff]
    %v258 = vld [vmem:[#allocation2 + $0x120] sm:$0xff]
    %v259 = vld [vmem:[#allocation2 + $0x128] sm:$0xff]
    %v260 = vld [vmem:[#allocation2 + $0x130] sm:$0xff]
    %v261 = vld [vmem:[#allocation2 + $0x138] sm:$0xff]
    %v262 = vld [vmem:[#allocation2 + $0x140] sm:$0xff]
    %v263 = vld [vmem:[#allocation2 + $0x148] sm:$0xff]
    %v264 = vld [vmem:[#allocation2 + $0x150] sm:$0xff]
    %v265 = vld [vmem:[#allocation2 + $0x158] sm:$0xff]
    %v266 = vld [vmem:[#allocation2 + $0x160] sm:$0xff]
    %v267 = vld [vmem:[#allocation2 + $0x168] sm:$0xff]
    %v268 = vld [vmem:[#allocation2 + $0x170] sm:$0xff]
    %v269 = vld [vmem:[#allocation2 + $0x178] sm:$0xff]
    %s270 = scalar_lea.vmem %s2, 2
    %v271 = vld [vmem:[%s270] ss:$8 sm:$0x3]
    %v272 = vpack.c.bf16 %v253, %v253
    %v274 = vlaneseq
    %v275 = vshrl.u32 %v274, 7
    %v276 = vsub.s32 0, %v275
    %v277 = vrot.slane %v271, %v276
    %v278 = vlaneseq
    %v279 = vshrl.u32 %v278, 7
    %v280 = vsub.s32 1, %v279
    %v281 = vrot.slane %v271, %v280
    %v300 = vunpack.c.l.b16 %v254
    %v301 = vunpack.c.h.b16 %v254
    %v302 = vunpack.c.l.b16 %v255
    %v303 = vunpack.c.h.b16 %v255
    %v304 = vunpack.c.l.b16 %v256
    %v305 = vunpack.c.h.b16 %v256
    %v306 = vunpack.c.l.b16 %v257
    %v307 = vunpack.c.h.b16 %v257
    %v308 = vunpack.c.l.b16 %v258
    %v309 = vunpack.c.h.b16 %v258
    %v310 = vunpack.c.l.b16 %v259
    %v311 = vunpack.c.h.b16 %v259
    %v312 = vunpack.c.l.b16 %v260
    %v313 = vunpack.c.h.b16 %v260
    %v314 = vunpack.c.l.b16 %v261
    %v315 = vunpack.c.h.b16 %v261
    %v316 = vunpack.c.l.b16 %v262
    %v317 = vunpack.c.h.b16 %v262
    %v318 = vunpack.c.l.b16 %v263
    %v319 = vunpack.c.h.b16 %v263
    %v320 = vunpack.c.l.b16 %v264
    %v321 = vunpack.c.h.b16 %v264
    %v322 = vunpack.c.l.b16 %v265
    %v323 = vunpack.c.h.b16 %v265
    %v324 = vunpack.c.l.b16 %v266
    %v325 = vunpack.c.h.b16 %v266
    %v326 = vunpack.c.l.b16 %v267
    %v327 = vunpack.c.h.b16 %v267
    %v328 = vunpack.c.l.b16 %v268
    %v329 = vunpack.c.h.b16 %v268
    %v330 = vunpack.c.l.b16 %v269
    %v331 = vunpack.c.h.b16 %v269
    %v332 = vpack.c.b16 %v302, %v300
    %v333 = vpack.c.b16 %v303, %v301
    %v334 = vpack.c.b16 %v306, %v304
    %v335 = vpack.c.b16 %v307, %v305
    %v336 = vpack.c.b16 %v310, %v308
    %v337 = vpack.c.b16 %v311, %v309
    %v338 = vpack.c.b16 %v314, %v312
    %v339 = vpack.c.b16 %v315, %v313
    %v340 = vpack.c.b16 %v318, %v316
    %v341 = vpack.c.b16 %v319, %v317
    %v342 = vpack.c.b16 %v322, %v320
    %v343 = vpack.c.b16 %v323, %v321
    %v344 = vpack.c.b16 %v326, %v324
    %v345 = vpack.c.b16 %v327, %v325
    %v346 = vpack.c.b16 %v330, %v328
    %v347 = vpack.c.b16 %v331, %v329
    %364 = vmatprep.subr.bf16.mxu0 %v333
    %365 = vmatpush1.bf16.msra.mxu0 %v332
    %366 = vmatprep.subr.bf16.mxu0 %v335
    %367 = vmatpush1.bf16.msra.mxu0 %v334
    %368 = vmatprep.subr.bf16.mxu0 %v337
    %369 = vmatpush1.bf16.msra.mxu0 %v336
    %370 = vmatprep.subr.bf16.mxu0 %v339
    %371 = vmatpush1.bf16.msra.mxu0 %v338
    %372 = vmatprep.subr.bf16.mxu0 %v341
    %373 = vmatpush1.bf16.msra.mxu0 %v340
    %374 = vmatprep.subr.bf16.mxu0 %v343
    %375 = vmatpush1.bf16.msra.mxu0 %v342
    %376 = vmatprep.subr.bf16.mxu0 %v345
    %377 = vmatpush1.bf16.msra.mxu0 %v344
    %378 = vmatprep.subr.bf16.mxu0 %v347
    %379 = vmatpush1.bf16.msra.mxu0 %v346
    %380 = vmatprep.subr.bf16.mxu0 0
    %381 = vmatpush1.bf16.msra.mxu0 0
    %382 = vmatprep.subr.bf16.mxu0 0
    %383 = vmatpush1.bf16.msra.mxu0 0
    %384 = vmatprep.subr.bf16.mxu0 0
    %385 = vmatpush1.bf16.msra.mxu0 0
    %386 = vmatprep.subr.bf16.mxu0 0
    %387 = vmatpush1.bf16.msra.mxu0 0
    %388 = vmatprep.subr.bf16.mxu0 0
    %389 = vmatpush1.bf16.msra.mxu0 0
    %390 = vmatprep.subr.bf16.mxu0 0
    %391 = vmatpush1.bf16.msra.mxu0 0
    %392 = vmatprep.subr.bf16.mxu0 0
    %393 = vmatpush1.bf16.msra.mxu0 0
    %394 = vmatprep.subr.bf16.mxu0 0
    %395 = vmatpush1.bf16.msra.mxu0 0
    %396 = vmatprep.mubr.bf16.mxu0 0
    %397 = vmatmul.mubr.bf16.gmra.mrb[0].mxu0 %v272
    %v398 = vpop.f32.mrb[0].mxu0
    %v399 = vadd.f32 %v277, %v398
    %v400 = vpop.f32.mrb[0].mxu0
    %v401 = vadd.f32 %v281, %v400
    %v402 = vpop.f32.mrb[0].mxu0
    %v403 = vpop.f32.mrb[0].mxu0
    %404 = vdwg.mxu0
    %405 = vst [vmem:[%s3] sm:$0xff] %v399
    %v406 = vmul.f32 %v401, 0.5
    %v407 = vmul.f32 %v406, 1.442695
    %v408 = vpow.pop %v407
    %409 = vst [vmem:[%s3 + $0x8] sm:$0xff] %v408
    // Predicated region
    $region18: #{decoder_forward.1} parent=1 // pred_check
      _
    $region19: #{decoder_forward.1} parent=1 // pred_check_branch
      %411 = sbr.rel (0) target = $region21
    $region20: #{decoder_forward.1} parent=1 // pred_region
      _
    $region21: #{decoder_forward.1} parent=1 // pred_fallthru
      _
    // Predicated region
    $region22: #{decoder_forward.1} parent=1 // pred_check
      _
    $region23: #{decoder_forward.1} parent=1 // pred_check_branch
      %413 = sbr.rel (0) target = $region25
    $region24: #{decoder_forward.1} parent=1 // pred_region
      _
    $region25: #{decoder_forward.1} parent=1 // pred_fallthru
      _
    %414 = vsyncpa [#allocation3], 1

</llo_original>
